<compile_context>
chip_gen: v6e
topology: v6e:2x2x1
jax: 0.10.0
libtpu: 0.0.40
codegen_flags: <defaults>
</compile_context>

<pallas_src>
import math
import jax
import jax.numpy as jnp
from jax.experimental import pallas as pl
from jax.experimental.pallas import tpu as pltpu

MASK_RATIO = 0.5
BLOCK_SIZE = 8              # module default is 64; scaled down for small demo
LOSS_WEIGHT = 0.5
C_IN_PROJ = 512             # Conv2d in_channels (fixed by module __init__)
C_OUT_PROJ = 256 * 4 ** 2   # Conv2d out_channels = 4096
R = 4                       # PixelShuffle upscale factor


# ---------- kernel 1: mask_input ---------------------------------------------
def mask_input_pallas(img, block_mask, mask_token):
    """img (B,C,H,W), block_mask (B,1,Hb,Wb) in {0,1}, mask_token (C,)."""
    B, C, H, W = img.shape
    Hb, Wb = block_mask.shape[2], block_mask.shape[3]
    # TODO(synk): nearest-neighbour resize assumes Hb | H and Wb | W (true when
    # block_size divides H and W, as in the reference training configs).
    rh, rw = H // Hb, W // Wb

    # Expand the tiny mask along W only (Hb*W elements per batch, H//Hb times
    # smaller than the full-res mask).  The H expansion happens inside the
    # kernel, so the (B,1,H,W) mask is never materialized in HBM.
    mask_w = jnp.broadcast_to(
        block_mask.reshape(B, 1, Hb, Wb, 1),
        (B, 1, Hb, Wb, rw)).reshape(B, 1, Hb, W).astype(img.dtype)
    tok = mask_token.reshape(C, 1, 1).astype(img.dtype)

    # H tile = db mask rows (db | Hb); keep each image tile around <= 2 MiB so
    # in/out double buffers stay well under v7x's scoped-VMEM default.
    itemsize = jnp.dtype(img.dtype).itemsize
    bytes_per_mask_row = C * rh * W * itemsize
    cap = max(1, (2 * 1024 * 1024) // max(1, bytes_per_mask_row))
    db = 1
    for d in range(1, Hb + 1):
        if Hb % d == 0 and d <= cap:
            db = d
    TH = db * rh
    if TH != H and TH % 8 != 0:        # keep the sublane dim (8,128)-friendly
        db, TH = Hb, H
    n_h = Hb // db

    def kernel(tok_ref, mask_ref, img_ref, out_ref):
        # img_ref/out_ref: (C, TH, W); mask_ref: (Hb, W); tok_ref: (C, 1, 1)
        t = pl.program_id(1)
        tok_v = tok_ref[...]
        for jb in range(db):                         # static unroll, db small
            m = mask_ref[pl.ds(t * db + jb, 1), :]            # (1, W)
            sl = pl.ds(jb * rh, rh)
            x = img_ref[:, sl, :]                             # (C, rh, W)
            # same polarity as PyTorch: keep pixels where mask==1, token elsewhere
            out_ref[:, sl, :] = x * m + (1.0 - m) * tok_v

    return pl.pallas_call(
        kernel,
        out_shape=jax.ShapeDtypeStruct((B, C, H, W), img.dtype),
        grid=(B, n_h),
        in_specs=[
            pl.BlockSpec((C, 1, 1), lambda b, t: (0, 0, 0)),               # token
            pl.BlockSpec((None, None, Hb, W), lambda b, t: (b, 0, 0, 0)),  # mask
            pl.BlockSpec((None, C, TH, W), lambda b, t: (b, 0, t, 0)),     # image
        ],
        out_specs=pl.BlockSpec((None, C, TH, W), lambda b, t: (b, 0, t, 0)),
        compiler_params=pltpu.CompilerParams(
            dimension_semantics=("parallel", "parallel")),
    )(tok, mask_w, img)


# ---------- kernel 2: proj(Conv1x1 + PixelShuffle) fused with MSE loss -------
def proj_mse_loss_pallas(stu_feat, weight, bias, sam_feat, loss_weight):
    """stu_feat (B,512,h,w), weight (4096,512), bias (4096,),
       sam_feat (B,256,4h,4w)  ->  scalar loss = loss_weight * mse(proj, sam)."""
    B, K, h, w = stu_feat.shape
    N = weight.shape[0]
    Cout = N // (R * R)
    M = B * h * w

    # bf16 MXU inputs (f32 accumulation in-kernel).  Cast *before* the layout
    # transposes so the wrapper-side HBM passes are half-width too.
    a = stu_feat.astype(jnp.bfloat16).transpose(0, 2, 3, 1).reshape(M, K)
    w_t = weight.astype(jnp.bfloat16).T                       # (K, N), resident
    bias2 = bias.reshape(1, N).astype(jnp.float32)
    # Inverse PixelShuffle(4): bring the frozen (stop-gradient) SAM target into
    # the same (M, N) layout as the conv output, kept in bf16 (MSE target only).
    # TODO(synk): fold this permute into the SAM encoder output to remove the
    # extra HBM pass entirely.
    sam2d = (sam_feat.astype(jnp.bfloat16)
             .reshape(B, Cout, h, R, w, R)
             .transpose(0, 2, 4, 1, 3, 5)
             .reshape(M, N))

    # Pad M up to a multiple of TM so the MXU always sees full tiles; padded
    # rows are masked out of the loss inside the kernel.
    TM = 256
    M_pad = ((M + TM - 1) // TM) * TM
    if M_pad != M:
        a = jnp.pad(a, ((0, M_pad - M), (0, 0)))
        sam2d = jnp.pad(sam2d, ((0, M_pad - M), (0, 0)))
    nm = M_pad // TM
    need_row_mask = (M_pad != M)

    def kernel(a_ref, w_ref, b_ref, s_ref, out_ref):
        i = pl.program_id(0)
        acc = jnp.dot(a_ref[...], w_ref[...],
                      preferred_element_type=jnp.float32) + b_ref[...]
        d = acc - s_ref[...].astype(jnp.float32)
        if need_row_mask:                       # static: only when M was padded
            rows = jax.lax.broadcasted_iota(jnp.int32, (TM, 1), 0)
            d = jnp.where(rows < (M - i * TM), d, 0.0)
        # lane-dense per-tile partial: reduce the M (sublane) axis only.
        out_ref[...] = jnp.sum(d * d, axis=0, keepdims=True)

    partials = pl.pallas_call(
        kernel,
        out_shape=jax.ShapeDtypeStruct((nm, N), jnp.float32),
        grid=(nm,),
        in_specs=[
            pl.BlockSpec((TM, K), lambda i: (i, 0)),   # activations, streamed once
            pl.BlockSpec((K, N), lambda i: (0, 0)),    # weight, VMEM-resident (4 MiB bf16)
            pl.BlockSpec((1, N), lambda i: (0, 0)),    # bias, VMEM-resident
            pl.BlockSpec((TM, N), lambda i: (i, 0)),   # SAM target, bf16, streamed once
        ],
        out_specs=pl.BlockSpec((1, N), lambda i: (i, 0)),
        compiler_params=pltpu.CompilerParams(
            dimension_semantics=("parallel",),
            vmem_limit_bytes=48 * 1024 * 1024),
    )(a, w_t, bias2, sam2d)

    # Cross-tile reduction + loss_weight/(M*N) scaling outside the kernel (no
    # dependence on sequential grid order -> megacore-safe).
    return (float(loss_weight) / float(M * N)) * jnp.sum(partials)


# ---------- external-network stubs (deterministic) ---------------------------
def student_backbone_stub(masked_img, proj_mat):
    # TODO(synk): stand-in for student_model.extract_lr_mask_feature_only(...)[-1]
    B, C, H, W = masked_img.shape
    h, w = H // 8, W // 8
    pooled = masked_img.reshape(B, C, h, 8, w, 8).mean(axis=(3, 5))
    return jnp.einsum('oc,bchw->bohw', proj_mat, pooled)          # (B,512,h,w)


def sam_encoder_stub(target_img, proj_mat):
    # TODO(synk): stand-in for frozen Sam_vit_h/b image encoder (external checkpoint)
    B, C, H, W = target_img.shape
    h, w = H // 2, W // 2
    pooled = target_img.reshape(B, C, h, 2, w, 2).mean(axis=(3, 5))
    return jax.lax.stop_gradient(
        jnp.einsum('oc,bchw->bohw', proj_mat, pooled))            # (B,256,4h',4w')


# ---------- full forward ------------------------------------------------------
def sam_consistency_forward(params, target_img, rng):
    B, _, H, W = target_img.shape
    Hb, Wb = round(H / BLOCK_SIZE), round(W / BLOCK_SIZE)
    rand = jax.random.uniform(rng, (B, 1, Hb, Wb), jnp.float32)
    block_mask = (rand > MASK_RATIO).astype(jnp.float32)

    masked_img = mask_input_pallas(target_img, block_mask, params['mask_token'])
    stu_feat = student_backbone_stub(masked_img, params['stu_stub'])
    sam_feat = sam_encoder_stub(target_img, params['sam_stub'])
    loss = proj_mse_loss_pallas(stu_feat, params['proj_w'], params['proj_b'],
                                sam_feat, LOSS_WEIGHT)
    return {'loss_last_level': loss}


if __name__ == "__main__":
    key = jax.random.PRNGKey(0)
    k_tok, k_w, k_b, k_s1, k_s2, k_img, k_mask = jax.random.split(key, 7)

    # nn.Parameter(torch.zeros(1,3,1,1)) with trunc_normal_(std=0.02)
    mask_token = 0.02 * jax.random.truncated_normal(
        k_tok, -2.0, 2.0, (3,), jnp.float32)
    # Conv2d(512, 4096, 1) default init: uniform(+-1/sqrt(fan_in))
    bound = 1.0 / math.sqrt(C_IN_PROJ)
    proj_w = jax.random.uniform(k_w, (C_OUT_PROJ, C_IN_PROJ), jnp.float32,
                                -bound, bound)
    proj_b = jax.random.uniform(k_b, (C_OUT_PROJ,), jnp.float32, -bound, bound)
    stu_stub = 0.1 * jax.random.normal(k_s1, (C_IN_PROJ, 3), jnp.float32)
    sam_stub = 0.1 * jax.random.normal(k_s2, (C_OUT_PROJ // (R * R), 3),
                                       jnp.float32)
    params = dict(mask_token=mask_token, proj_w=proj_w, proj_b=proj_b,
                  stu_stub=stu_stub, sam_stub=sam_stub)

    target_img = jax.random.normal(k_img, (2, 3, 32, 32), jnp.float32)

    align_loss = sam_consistency_forward(params, target_img, k_mask)
    jax.block_until_ready(align_loss['loss_last_level'])
    assert align_loss['loss_last_level'].shape == ()
    print("KERNEL_OK")
</pallas_src>

<mosaic_0001>
module attributes {stable_mosaic.version = 11 : i64} {
  func.func @kernel(%arg0: i32, %arg1: i32, %arg2: memref<3x1x1xf32, #tpu.memory_space<vmem>>, %arg3: memref<1x1x4x32xf32, #tpu.memory_space<vmem>>, %arg4: memref<1x3x32x32xf32, #tpu.memory_space<vmem>>, %arg5: memref<1x3x32x32xf32, #tpu.memory_space<vmem>>) attributes {dimension_semantics = [#tpu.dimension_semantics<parallel>, #tpu.dimension_semantics<parallel>], iteration_bounds = array<i64: 2, 1>, scalar_prefetch = 0 : i64, scratch_operands = 0 : i64, tpu.core_type = #tpu.core_type<tc>, window_params = [{pipeline_mode = #tpu.pipeline_mode<synchronous>, transform_indices = @transform_0, window_bounds = array<i64: 3, 1, 1>}, {transform_indices = @transform_1, window_bounds = array<i64: 1, 1, 4, 32>}, {transform_indices = @transform_2, window_bounds = array<i64: 1, 3, 32, 32>}, {transform_indices = @transform_3, window_bounds = array<i64: 1, 3, 32, 32>}]} {
    %c0 = arith.constant 0 : index
    %c0_0 = arith.constant 0 : index
    %c0_1 = arith.constant 0 : index
    %0 = vector.load %arg2[%c0, %c0_0, %c0_1] : memref<3x1x1xf32, #tpu.memory_space<vmem>>, vector<3x1x1xf32>
    %c4_i32 = arith.constant 4 : i32
    %1 = arith.muli %arg1, %c4_i32 : i32
    %c0_i32 = arith.constant 0 : i32
    %2 = arith.addi %1, %c0_i32 : i32
    %c0_2 = arith.constant 0 : index
    %c0_3 = arith.constant 0 : index
    %3 = arith.index_cast %2 : i32 to index
    %c0_4 = arith.constant 0 : index
    %4 = vector.load %arg3[%c0_2, %c0_3, %3, %c0_4] : memref<1x1x4x32xf32, #tpu.memory_space<vmem>>, vector<1x1x1x32xf32>
    %5 = vector.shape_cast %4 : vector<1x1x1x32xf32> to vector<1x32xf32>
    %c0_5 = arith.constant 0 : index
    %c0_6 = arith.constant 0 : index
    %c0_7 = arith.constant 0 : index
    %c0_8 = arith.constant 0 : index
    %6 = vector.load %arg4[%c0_5, %c0_6, %c0_7, %c0_8] : memref<1x3x32x32xf32, #tpu.memory_space<vmem>>, vector<1x3x8x32xf32>
    %7 = vector.shape_cast %6 : vector<1x3x8x32xf32> to vector<3x8x32xf32>
    %8 = vector.shape_cast %5 : vector<1x32xf32> to vector<1x1x32xf32>
    %9 = vector.broadcast %8 : vector<1x1x32xf32> to vector<3x8x32xf32>
    %10 = arith.mulf %7, %9 : vector<3x8x32xf32>
    %cst = arith.constant 1.000000e+00 : f32
    %11 = vector.broadcast %cst : f32 to vector<1x32xf32>
    %12 = arith.subf %11, %5 : vector<1x32xf32>
    %13 = vector.shape_cast %12 : vector<1x32xf32> to vector<1x1x32xf32>
    %14 = vector.broadcast %13 : vector<1x1x32xf32> to vector<3x1x32xf32>
    %15 = vector.broadcast %0 : vector<3x1x1xf32> to vector<3x1x32xf32>
    %16 = arith.mulf %14, %15 : vector<3x1x32xf32>
    %17 = vector.broadcast %16 : vector<3x1x32xf32> to vector<3x8x32xf32>
    %18 = arith.addf %10, %17 : vector<3x8x32xf32>
    %c0_9 = arith.constant 0 : index
    %c0_10 = arith.constant 0 : index
    %c0_11 = arith.constant 0 : index
    %c0_12 = arith.constant 0 : index
    %19 = vector.load %arg5[%c0_9, %c0_10, %c0_11, %c0_12] : memref<1x3x32x32xf32, #tpu.memory_space<vmem>>, vector<1x3x8x32xf32>
    %20 = vector.shape_cast %19 : vector<1x3x8x32xf32> to vector<3x8x32xf32>
    %21 = vector.shape_cast %18 : vector<3x8x32xf32> to vector<1x3x8x32xf32>
    tpu.vector_store %arg5[%c0_9, %c0_10, %c0_11, %c0_12], %21 {strides = array<i32>} : memref<1x3x32x32xf32, #tpu.memory_space<vmem>>, vector<1x3x8x32xf32>,
    %c4_i32_13 = arith.constant 4 : i32
    %22 = arith.muli %arg1, %c4_i32_13 : i32
    %c1_i32 = arith.constant 1 : i32
    %23 = arith.addi %22, %c1_i32 : i32
    %c0_14 = arith.constant 0 : index
    %c0_15 = arith.constant 0 : index
    %24 = arith.index_cast %23 : i32 to index
    %c0_16 = arith.constant 0 : index
    %25 = vector.load %arg3[%c0_14, %c0_15, %24, %c0_16] : memref<1x1x4x32xf32, #tpu.memory_space<vmem>>, vector<1x1x1x32xf32>
    %26 = vector.shape_cast %25 : vector<1x1x1x32xf32> to vector<1x32xf32>
    %c0_17 = arith.constant 0 : index
    %c0_18 = arith.constant 0 : index
    %c8 = arith.constant 8 : index
    %c0_19 = arith.constant 0 : index
    %27 = vector.load %arg4[%c0_17, %c0_18, %c8, %c0_19] : memref<1x3x32x32xf32, #tpu.memory_space<vmem>>, vector<1x3x8x32xf32>
    %28 = vector.shape_cast %27 : vector<1x3x8x32xf32> to vector<3x8x32xf32>
    %29 = vector.shape_cast %26 : vector<1x32xf32> to vector<1x1x32xf32>
    %30 = vector.broadcast %29 : vector<1x1x32xf32> to vector<3x8x32xf32>
    %31 = arith.mulf %28, %30 : vector<3x8x32xf32>
    %cst_20 = arith.constant 1.000000e+00 : f32
    %32 = vector.broadcast %cst_20 : f32 to vector<1x32xf32>
    %33 = arith.subf %32, %26 : vector<1x32xf32>
    %34 = vector.shape_cast %33 : vector<1x32xf32> to vector<1x1x32xf32>
    %35 = vector.broadcast %34 : vector<1x1x32xf32> to vector<3x1x32xf32>
    %36 = vector.broadcast %0 : vector<3x1x1xf32> to vector<3x1x32xf32>
    %37 = arith.mulf %35, %36 : vector<3x1x32xf32>
    %38 = vector.broadcast %37 : vector<3x1x32xf32> to vector<3x8x32xf32>
    %39 = arith.addf %31, %38 : vector<3x8x32xf32>
    %c0_21 = arith.constant 0 : index
    %c0_22 = arith.constant 0 : index
    %c8_23 = arith.constant 8 : index
    %c0_24 = arith.constant 0 : index
    %40 = vector.load %arg5[%c0_21, %c0_22, %c8_23, %c0_24] : memref<1x3x32x32xf32, #tpu.memory_space<vmem>>, vector<1x3x8x32xf32>
    %41 = vector.shape_cast %40 : vector<1x3x8x32xf32> to vector<3x8x32xf32>
    %42 = vector.shape_cast %39 : vector<3x8x32xf32> to vector<1x3x8x32xf32>
    tpu.vector_store %arg5[%c0_21, %c0_22, %c8_23, %c0_24], %42 {strides = array<i32>} : memref<1x3x32x32xf32, #tpu.memory_space<vmem>>, vector<1x3x8x32xf32>,
    %c4_i32_25 = arith.constant 4 : i32
    %43 = arith.muli %arg1, %c4_i32_25 : i32
    %c2_i32 = arith.constant 2 : i32
    %44 = arith.addi %43, %c2_i32 : i32
    %c0_26 = arith.constant 0 : index
    %c0_27 = arith.constant 0 : index
    %45 = arith.index_cast %44 : i32 to index
    %c0_28 = arith.constant 0 : index
    %46 = vector.load %arg3[%c0_26, %c0_27, %45, %c0_28] : memref<1x1x4x32xf32, #tpu.memory_space<vmem>>, vector<1x1x1x32xf32>
    %47 = vector.shape_cast %46 : vector<1x1x1x32xf32> to vector<1x32xf32>
    %c0_29 = arith.constant 0 : index
    %c0_30 = arith.constant 0 : index
    %c16 = arith.constant 16 : index
    %c0_31 = arith.constant 0 : index
    %48 = vector.load %arg4[%c0_29, %c0_30, %c16, %c0_31] : memref<1x3x32x32xf32, #tpu.memory_space<vmem>>, vector<1x3x8x32xf32>
    %49 = vector.shape_cast %48 : vector<1x3x8x32xf32> to vector<3x8x32xf32>
    %50 = vector.shape_cast %47 : vector<1x32xf32> to vector<1x1x32xf32>
    %51 = vector.broadcast %50 : vector<1x1x32xf32> to vector<3x8x32xf32>
    %52 = arith.mulf %49, %51 : vector<3x8x32xf32>
    %cst_32 = arith.constant 1.000000e+00 : f32
    %53 = vector.broadcast %cst_32 : f32 to vector<1x32xf32>
    %54 = arith.subf %53, %47 : vector<1x32xf32>
    %55 = vector.shape_cast %54 : vector<1x32xf32> to vector<1x1x32xf32>
    %56 = vector.broadcast %55 : vector<1x1x32xf32> to vector<3x1x32xf32>
    %57 = vector.broadcast %0 : vector<3x1x1xf32> to vector<3x1x32xf32>
    %58 = arith.mulf %56, %57 : vector<3x1x32xf32>
    %59 = vector.broadcast %58 : vector<3x1x32xf32> to vector<3x8x32xf32>
    %60 = arith.addf %52, %59 : vector<3x8x32xf32>
    %c0_33 = arith.constant 0 : index
    %c0_34 = arith.constant 0 : index
    %c16_35 = arith.constant 16 : index
    %c0_36 = arith.constant 0 : index
    %61 = vector.load %arg5[%c0_33, %c0_34, %c16_35, %c0_36] : memref<1x3x32x32xf32, #tpu.memory_space<vmem>>, vector<1x3x8x32xf32>
    %62 = vector.shape_cast %61 : vector<1x3x8x32xf32> to vector<3x8x32xf32>
    %63 = vector.shape_cast %60 : vector<3x8x32xf32> to vector<1x3x8x32xf32>
    tpu.vector_store %arg5[%c0_33, %c0_34, %c16_35, %c0_36], %63 {strides = array<i32>} : memref<1x3x32x32xf32, #tpu.memory_space<vmem>>, vector<1x3x8x32xf32>,
    %c4_i32_37 = arith.constant 4 : i32
    %64 = arith.muli %arg1, %c4_i32_37 : i32
    %c3_i32 = arith.constant 3 : i32
    %65 = arith.addi %64, %c3_i32 : i32
    %c0_38 = arith.constant 0 : index
    %c0_39 = arith.constant 0 : index
    %66 = arith.index_cast %65 : i32 to index
    %c0_40 = arith.constant 0 : index
    %67 = vector.load %arg3[%c0_38, %c0_39, %66, %c0_40] : memref<1x1x4x32xf32, #tpu.memory_space<vmem>>, vector<1x1x1x32xf32>
    %68 = vector.shape_cast %67 : vector<1x1x1x32xf32> to vector<1x32xf32>
    %c0_41 = arith.constant 0 : index
    %c0_42 = arith.constant 0 : index
    %c24 = arith.constant 24 : index
    %c0_43 = arith.constant 0 : index
    %69 = vector.load %arg4[%c0_41, %c0_42, %c24, %c0_43] : memref<1x3x32x32xf32, #tpu.memory_space<vmem>>, vector<1x3x8x32xf32>
    %70 = vector.shape_cast %69 : vector<1x3x8x32xf32> to vector<3x8x32xf32>
    %71 = vector.shape_cast %68 : vector<1x32xf32> to vector<1x1x32xf32>
    %72 = vector.broadcast %71 : vector<1x1x32xf32> to vector<3x8x32xf32>
    %73 = arith.mulf %70, %72 : vector<3x8x32xf32>
    %cst_44 = arith.constant 1.000000e+00 : f32
    %74 = vector.broadcast %cst_44 : f32 to vector<1x32xf32>
    %75 = arith.subf %74, %68 : vector<1x32xf32>
    %76 = vector.shape_cast %75 : vector<1x32xf32> to vector<1x1x32xf32>
    %77 = vector.broadcast %76 : vector<1x1x32xf32> to vector<3x1x32xf32>
    %78 = vector.broadcast %0 : vector<3x1x1xf32> to vector<3x1x32xf32>
    %79 = arith.mulf %77, %78 : vector<3x1x32xf32>
    %80 = vector.broadcast %79 : vector<3x1x32xf32> to vector<3x8x32xf32>
    %81 = arith.addf %73, %80 : vector<3x8x32xf32>
    %c0_45 = arith.constant 0 : index
    %c0_46 = arith.constant 0 : index
    %c24_47 = arith.constant 24 : index
    %c0_48 = arith.constant 0 : index
    %82 = vector.load %arg5[%c0_45, %c0_46, %c24_47, %c0_48] : memref<1x3x32x32xf32, #tpu.memory_space<vmem>>, vector<1x3x8x32xf32>
    %83 = vector.shape_cast %82 : vector<1x3x8x32xf32> to vector<3x8x32xf32>
    %84 = vector.shape_cast %81 : vector<3x8x32xf32> to vector<1x3x8x32xf32>
    tpu.vector_store %arg5[%c0_45, %c0_46, %c24_47, %c0_48], %84 {strides = array<i32>} : memref<1x3x32x32xf32, #tpu.memory_space<vmem>>, vector<1x3x8x32xf32>,
    return
  }
  func.func @transform_0(%arg0: i32, %arg1: i32) -> (i32, i32, i32) {
    %c0_i32 = arith.constant 0 : i32
    %c0_i32_0 = arith.constant 0 : i32
    %c0_i32_1 = arith.constant 0 : i32
    %c0_i32_2 = arith.constant 0 : i32
    return %c0_i32, %c0_i32_0, %c0_i32_1 : i32, i32, i32
  }
  func.func @transform_1(%arg0: i32, %arg1: i32) -> (i32, i32, i32, i32) {
    %c0_i32 = arith.constant 0 : i32
    %c0_i32_0 = arith.constant 0 : i32
    %c0_i32_1 = arith.constant 0 : i32
    %c0_i32_2 = arith.constant 0 : i32
    return %arg0, %c0_i32, %c0_i32_0, %c0_i32_1 : i32, i32, i32, i32
  }
  func.func @transform_2(%arg0: i32, %arg1: i32) -> (i32, i32, i32, i32) {
    %c0_i32 = arith.constant 0 : i32
    %c0_i32_0 = arith.constant 0 : i32
    %c0_i32_1 = arith.constant 0 : i32
    return %arg0, %c0_i32, %arg1, %c0_i32_0 : i32, i32, i32, i32
  }
  func.func @transform_3(%arg0: i32, %arg1: i32) -> (i32, i32, i32, i32) {
    %c0_i32 = arith.constant 0 : i32
    %c0_i32_0 = arith.constant 0 : i32
    %c0_i32_1 = arith.constant 0 : i32
    return %arg0, %c0_i32, %arg1, %c0_i32_0 : i32, i32, i32, i32
  }
}

</mosaic_0001>

<llo_original>
// kernel: tpu_custom_call.1
$region0: #{tpu_custom_call.1}
  #allocation0 [shape = 'u32[]', space=smem, size = 0x4, offset = 0x4, fixed_abs, tag = 'smem constant byte address 0x4 - core index']
  #allocation1 [shape = 'u32[144,128]{1,0:T(1,128)}', space=vmem, size = 0x12000, scoped, tag = 'internal scratch']
  %s0 = inlined_call_operand.vmem [shape: f32[3,1,1], index: 0, kind: input, shape index: {}]
  %s1 = inlined_call_operand.hbm [shape: f32[2,1,4,32], index: 1, kind: input, shape index: {}]
  %s2 = inlined_call_operand.hbm [shape: f32[2,3,32,32], index: 2, kind: input, shape index: {}]
  %s3 = inlined_call_operand.hbm [shape: f32[2,3,32,32], index: 3, kind: output, shape index: {}]
  %s4 = sld [smem:[#allocation0]]
  $region53: #{tpu_custom_call.1} parent=0
    _
  %s6 = ssub.s32 1, %s4
  %s7 = scalar_select 0, %s6, %s4
  $region1: #{tpu_custom_call.1} parent=0
    #allocation2 [shape = 'u8[4096]{0}', space=vmem, size = 0x1000, scoped, tag = 'input window, operand 1']
    #allocation3 [shape = 's32[2]{0}', space=sflag, size = 0x8, scoped, tag = 'scoped memory for tpu_custom_call.1']
    #allocation4 [shape = 's32[2]{0}', space=sflag, size = 0x8, scoped, tag = 'scoped memory for tpu_custom_call.1']
    #allocation5 [shape = 'u8[98304]{0}', space=vmem, size = 0x18000, scoped, tag = 'input window, operand 2']
    #allocation6 [shape = 's32[2]{0}', space=sflag, size = 0x8, scoped, tag = 'scoped memory for tpu_custom_call.1']
    #allocation7 [shape = 'u8[98304]{0}', space=vmem, size = 0x18000, scoped, tag = 'output window, operand 0']
    %8 = vsyncpa [#allocation3], 0
    %s9 = scalar_lea.sflag [#allocation3], 1
    %10 = vsyncpa %s9, 0
    %11 = vsyncpa [#allocation6], 0
    %s12 = scalar_lea.sflag [#allocation6], 1
    %13 = vsyncpa %s12, 0
    %14 = vsyncpa [#allocation4], 0
    %s15 = scalar_lea.sflag [#allocation4], 1
    %16 = vsyncpa %s15, 0
    loop: start=0, step=1, limit=4
    $region2: #{tpu_custom_call.1} parent=1 // loop_pre_header
      _
    $region3: #{tpu_custom_call.1} parent=1 // loop_header
      %s18 = sphi 0, %s22
      %p19 = scmp.ge.s32.totalorder %s18, 4
      %s25 = sphi 0, %s37
      %s26 = sphi 0, %s33
      %s27 = sphi 0, %s25
      %s28 = sphi 0, %s26
      %s29 = sphi 0, %s27
      %s30 = sphi 0, %s28
      %s38 = sphi 0, %s38
      %s40 = sphi 0, %s38
      %s41 = sphi 0, %s40
      %s55 = sphi 0, %s41
      %s61 = sphi 0, %s63
      %s64 = sphi 0, %s61
      %s65 = sphi 0, %s64
      %s81 = sphi 0, %s65
      %s89 = sphi 0, %s91
      %s92 = sphi 0, %s89
      %s93 = sphi 0, %s92
      %s109 = sphi 0, %s93
      %s117 = sphi 0, %s119
      %s120 = sphi 0, %s117
      %s121 = sphi 0, %s120
      %s137 = sphi 0, %s121
    $region4: #{tpu_custom_call.1} parent=1 // loop_header_branch
      %21 = sbr.rel (%p19) target = $region8
    $region5: #{tpu_custom_call.1} parent=1 // loop_body
      %s23 = ssub.s32 %s18, 1
      %s24 = ssub.s32 %s18, 2
      %s31 = sadd.s32 1, %s26
      %p32 = scmp.ge.s32.totalorder %s31, 1
      %s33 = scalar_select %p32, 0, %s31
      %s34 = sadd.s32 1, %s25
      %s35 = scalar_select %p32, %s34, %s25
      %p36 = scmp.ge.s32.totalorder %s35, 2
      %s37 = scalar_select %p36, 0, %s35
      %s39 = sadd.s32 %s38, 1
      %p42 = scmp.eq.s32.totalorder %s18, 1
      %p43 = scmp.ne.s32.totalorder %s38, %s40
      %p44 = scmp.eq.s32.totalorder %s18, 0
      %p45 = por %p43, %p44
      %p46 = scmp.ne.s32.totalorder %s38, %s40
      %p47 = scmp.eq.s32.totalorder %s23, 1
      %p48 = por %p46, %p47
      %p49 = scmp.ne.s32.totalorder %s40, %s41
      %p50 = scmp.eq.s32.totalorder %s23, 0
      %p51 = por %p49, %p50
      %p52 = scmp.ne.s32.totalorder %s40, %s41
      %p53 = scmp.eq.s32.totalorder %s24, 1
      %p54 = por %p52, %p53
      %p56 = scmp.ne.s32.totalorder %s41, %s55
      %p57 = scmp.eq.s32.totalorder %s24, 0
      %p58 = por %p56, %p57
      %s59 = ssub.s32 %s25, %s37
      %p60 = scmp.eq.s32.totalorder %s59, 0
      %s62 = sadd.s32 %s61, 1
      %s63 = scalar_select %p60, %s61, %s62
      %p66 = pneg %p60
      %p67 = scmp.eq.s32.totalorder %s18, 1
      %p68 = por %p66, %p67
      %p69 = scmp.ne.s32.totalorder %s61, %s64
      %p70 = scmp.eq.s32.totalorder %s18, 0
      %p71 = por %p69, %p70
      %p72 = scmp.ne.s32.totalorder %s61, %s64
      %p73 = scmp.eq.s32.totalorder %s23, 1
      %p74 = por %p72, %p73
      %p75 = scmp.ne.s32.totalorder %s64, %s65
      %p76 = scmp.eq.s32.totalorder %s23, 0
      %p77 = por %p75, %p76
      %p78 = scmp.ne.s32.totalorder %s64, %s65
      %p79 = scmp.eq.s32.totalorder %s24, 1
      %p80 = por %p78, %p79
      %p82 = scmp.ne.s32.totalorder %s65, %s81
      %p83 = scmp.eq.s32.totalorder %s24, 0
      %p84 = por %p82, %p83
      %s85 = ssub.s32 %s25, %s37
      %s86 = ssub.s32 %s26, %s33
      %s87 = sor.u32 %s85, %s86
      %p88 = scmp.eq.s32.totalorder %s87, 0
      %s90 = sadd.s32 %s89, 1
      %s91 = scalar_select %p88, %s89, %s90
      %p94 = pneg %p88
      %p95 = scmp.eq.s32.totalorder %s18, 1
      %p96 = por %p94, %p95
      %p97 = scmp.ne.s32.totalorder %s89, %s92
      %p98 = scmp.eq.s32.totalorder %s18, 0
      %p99 = por %p97, %p98
      %p100 = scmp.ne.s32.totalorder %s89, %s92
      %p101 = scmp.eq.s32.totalorder %s23, 1
      %p102 = por %p100, %p101
      %p103 = scmp.ne.s32.totalorder %s92, %s93
      %p104 = scmp.eq.s32.totalorder %s23, 0
      %p105 = por %p103, %p104
      %p106 = scmp.ne.s32.totalorder %s92, %s93
      %p107 = scmp.eq.s32.totalorder %s24, 1
      %p108 = por %p106, %p107
      %p110 = scmp.ne.s32.totalorder %s93, %s109
      %p111 = scmp.eq.s32.totalorder %s24, 0
      %p112 = por %p110, %p111
      %s113 = ssub.s32 %s25, %s37
      %s114 = ssub.s32 %s26, %s33
      %s115 = sor.u32 %s113, %s114
      %p116 = scmp.eq.s32.totalorder %s115, 0
      %s118 = sadd.s32 %s117, 1
      %s119 = scalar_select %p116, %s117, %s118
      %p122 = pneg %p116
      %p123 = scmp.eq.s32.totalorder %s18, 1
      %p124 = por %p122, %p123
      %p125 = scmp.ne.s32.totalorder %s117, %s120
      %p126 = scmp.eq.s32.totalorder %s18, 0
      %p127 = por %p125, %p126
      %p128 = scmp.ne.s32.totalorder %s117, %s120
      %p129 = scmp.eq.s32.totalorder %s23, 1
      %p130 = por %p128, %p129
      %p131 = scmp.ne.s32.totalorder %s120, %s121
      %p132 = scmp.eq.s32.totalorder %s23, 0
      %p133 = por %p131, %p132
      %p134 = scmp.ne.s32.totalorder %s120, %s121
      %p135 = scmp.eq.s32.totalorder %s24, 1
      %p136 = por %p134, %p135
      %p138 = scmp.ne.s32.totalorder %s121, %s137
      %p139 = scmp.eq.s32.totalorder %s24, 0
      %p140 = por %p138, %p139
      %p141 = scmp.le.s32.totalorder 1, %s18
      %p142 = scmp.lt.s32.totalorder %s18, 3
      %p143 = pnand %p141, %p142
      %p144 = pneg %p143
      // Predicated region
      $region9: #{tpu_custom_call.1} parent=5 // pred_check
        _
      $region10: #{tpu_custom_call.1} parent=5 // pred_check_branch
        %146 = sbr.rel (%p143) target = $region12
      $region11: #{tpu_custom_call.1} parent=5 // pred_region
        %s147 = ssub.s32 %s18, 1
        // Predicated region
        $region13: #{tpu_custom_call.1} parent=11 // pred_check
          %p148 = pneg %p51
        $region14: #{tpu_custom_call.1} parent=11 // pred_check_branch
          %150 = sbr.rel (%p148) target = $region16
        $region15: #{tpu_custom_call.1} parent=11 // pred_region
          _
        $region16: #{tpu_custom_call.1} parent=11 // pred_fallthru
          _
      $region12: #{tpu_custom_call.1} parent=5 // pred_fallthru
        _
      %p151 = scmp.lt.s32.totalorder %s18, 2
      // Predicated region
      $region17: #{tpu_custom_call.1} parent=5 // pred_check
        %p152 = pneg %p151
      $region18: #{tpu_custom_call.1} parent=5 // pred_check_branch
        %154 = sbr.rel (%p152) target = $region20
      $region19: #{tpu_custom_call.1} parent=5 // pred_region
        // Predicated region
        $region21: #{tpu_custom_call.1} parent=19 // pred_check
          %p155 = pneg %p71
        $region22: #{tpu_custom_call.1} parent=19 // pred_check_branch
          %157 = sbr.rel (%p155) target = $region24
        $region23: #{tpu_custom_call.1} parent=19 // pred_region
          %s158 = sand.u32 %s61, 1
          %s159 = scalar_lea.sflag [#allocation3], %s158
          %s160 = sand.u32 %s61, 1
          %s161 = smul.addr %s160, 4
          %s162 = scalar_lea.vmem [#allocation2], %s161
          %s164 = ssub.s32 64, 64
          %165 = vsyncadd %s159, %s164
          %s166 = smul.addr %s25, 64
          %s167 = scalar_lea.hbm %s1, %s166
          %s169 = sshll.u32 %s162, 4
          %s170 = int_to_ptr.vmem [resolvable:$true] %s169
          %172 = dma.hbm_to_vmem [thread:$0]  %s167, 64, %s170, %s159
        $region24: #{tpu_custom_call.1} parent=19 // pred_fallthru
          _
        // Predicated region
        $region25: #{tpu_custom_call.1} parent=19 // pred_check
          %p173 = pneg %p99
        $region26: #{tpu_custom_call.1} parent=19 // pred_check_branch
          %175 = sbr.rel (%p173) target = $region28
        $region27: #{tpu_custom_call.1} parent=19 // pred_region
          %s176 = sand.u32 %s89, 1
          %s177 = scalar_lea.sflag [#allocation6], %s176
          %s178 = sand.u32 %s89, 1
          %s179 = smul.addr %s178, 96
          %s180 = scalar_lea.vmem [#allocation5], %s179
          %s181 = smul.u32 4, %s26
          %s183 = ssub.s32 1536, 1536
          %184 = vsyncadd %s177, %s183
          %s185 = smul.addr %s25, 12
          %s186 = sadd.s32 %s181, %s185
          %s187 = smul.addr %s186, 128
          %s188 = scalar_lea.hbm %s2, %s187
          %s189 = sshll.u32 %s180, 4
          %s190 = int_to_ptr.vmem [resolvable:$true] %s189
          %195 = dma.hbm_to_vmem [thread:$0]  %s188, 1536, %s190, %s177, 128, 128, 8
        $region28: #{tpu_custom_call.1} parent=19 // pred_fallthru
          _
      $region20: #{tpu_custom_call.1} parent=5 // pred_fallthru
        _
      %p196 = scmp.le.s32.totalorder 1, %s18
      %p197 = scmp.lt.s32.totalorder %s18, 3
      %p198 = pnand %p196, %p197
      %p199 = pneg %p198
      // Predicated region
      $region29: #{tpu_custom_call.1} parent=5 // pred_check
        _
      $region30: #{tpu_custom_call.1} parent=5 // pred_check_branch
        %201 = sbr.rel (%p198) target = $region32
      $region31: #{tpu_custom_call.1} parent=5 // pred_region
        %s202 = ssub.s32 %s18, 1
        %s203 = sand.u32 %s64, 1
        %s204 = scalar_lea.sflag [#allocation3], %s203
        %s205 = sand.u32 %s64, 1
        %s206 = smul.addr %s205, 4
        %s207 = scalar_lea.vmem [#allocation2], %s206
        // Predicated region
        $region33: #{tpu_custom_call.1} parent=31 // pred_check
          %p208 = pneg %p77
        $region34: #{tpu_custom_call.1} parent=31 // pred_check_branch
          %210 = sbr.rel (%p208) target = $region36
        $region35: #{tpu_custom_call.1} parent=31 // pred_region
          %211 = dma.done %s204, 64
        $region36: #{tpu_custom_call.1} parent=31 // pred_fallthru
          _
        %s212 = sand.u32 %s92, 1
        %s213 = scalar_lea.sflag [#allocation6], %s212
        %s214 = sand.u32 %s92, 1
        %s215 = smul.addr %s214, 96
        %s216 = scalar_lea.vmem [#allocation5], %s215
        // Predicated region
        $region37: #{tpu_custom_call.1} parent=31 // pred_check
          %p217 = pneg %p105
        $region38: #{tpu_custom_call.1} parent=31 // pred_check_branch
          %219 = sbr.rel (%p217) target = $region40
        $region39: #{tpu_custom_call.1} parent=31 // pred_region
          %220 = dma.done %s213, 1536
        $region40: #{tpu_custom_call.1} parent=31 // pred_fallthru
          _
        %p221 = pneg %p51
        %p222 = pneg %p48
        %s223 = sand.u32 %s64, 1
        %s224 = scalar_lea.sflag [#allocation3], %s223
        %s225 = sand.u32 %s64, 1
        %s226 = smul.addr %s225, 4
        %s227 = scalar_lea.vmem [#allocation2], %s226
        %p228 = pneg %p77
        %p229 = pneg %p74
        %s230 = sand.u32 %s92, 1
        %s231 = scalar_lea.sflag [#allocation6], %s230
        %s232 = sand.u32 %s92, 1
        %s233 = smul.addr %s232, 96
        %s234 = scalar_lea.vmem [#allocation5], %s233
        %p235 = pneg %p105
        %p236 = pneg %p102
        %p237 = pneg %p133
        %p238 = pneg %p130
        %s239 = sand.u32 %s120, 1
        %s240 = scalar_lea.sflag [#allocation4], %s239
        %s241 = sand.u32 %s120, 1
        %s242 = smul.addr %s241, 96
        %s243 = scalar_lea.vmem [#allocation7], %s242
        %s244 = smul.u32 4, %s28
        %s245 = smul.u32 4, %s28
        %v246 = vld [vmem:[%s0] sm:$0x1]
        %v247 = vld [vmem:[%s0 + $0x1] sm:$0x1]
        %v248 = vld [vmem:[%s0 + $0x2] sm:$0x1]
        %s249 = smul.u32 %s28, 4
        %s250 = scalar_lea.vmem %s207, %s249 [#allocation2]
        %v251 = vld [vmem:[%s250] sm:$0x1]
        %v252 = vld [vmem:[%s216] sm:$0xff]
        %v253 = vld [vmem:[%s216 + $0x20] sm:$0xff]
        %v254 = vld [vmem:[%s216 + $0x40] sm:$0xff]
        %v255 = vlaneseq
        %v256 = vshrl.u32 %v255, 7
        %v257 = vsub.s32 0, %v256
        %v258 = vrot.slane %v251, %v257
        %v259 = vmul.f32 %v252, %v258
        %v260 = vmul.f32 %v253, %v258
        %v261 = vmul.f32 %v254, %v258
        %v262 = vsub.f32 1.0, %v251
        %264 = vset.pattern.permute.xlu0 0
        %265 = vperm.xlu0 %264, %v246
        %v266 = vpop.permute.xlu0 %265
        %v268 = vlaneseq
        %v269 = vshrl.u32 %v268, 7
        %v270 = vsub.s32 0, %v269
        %v271 = vrot.slane %v266, %v270
        %273 = vset.pattern.permute.xlu0 0
        %274 = vperm.xlu0 %273, %v247
        %v275 = vpop.permute.xlu0 %274
        %v277 = vlaneseq
        %v278 = vshrl.u32 %v277, 7
        %v279 = vsub.s32 0, %v278
        %v280 = vrot.slane %v275, %v279
        %282 = vset.pattern.permute.xlu0 0
        %283 = vperm.xlu0 %282, %v248
        %v284 = vpop.permute.xlu0 %283
        %v286 = vlaneseq
        %v287 = vshrl.u32 %v286, 7
        %v288 = vsub.s32 0, %v287
        %v289 = vrot.slane %v284, %v288
        %v290 = vmul.f32 %v262, %v271
        %v291 = vmul.f32 %v262, %v280
        %v292 = vmul.f32 %v262, %v289
        %v293 = vlaneseq
        %v294 = vshrl.u32 %v293, 7
        %v295 = vsub.s32 0, %v294
        %v296 = vrot.slane %v290, %v295
        %v297 = vlaneseq
        %v298 = vshrl.u32 %v297, 7
        %v299 = vsub.s32 0, %v298
        %v300 = vrot.slane %v291, %v299
        %v301 = vlaneseq
        %v302 = vshrl.u32 %v301, 7
        %v303 = vsub.s32 0, %v302
        %v304 = vrot.slane %v292, %v303
        %v305 = vadd.f32 %v259, %v296
        %v306 = vadd.f32 %v260, %v300
        %v307 = vadd.f32 %v261, %v304
        %vm308 = vcmask 261120
        %309 = vst.msk [vmem:[%s243] sm:$0xff] %vm308, %v305
        %310 = vst.msk [vmem:[%s243 + $0x20] sm:$0xff] %vm308, %v306
        %311 = vst.msk [vmem:[%s243 + $0x40] sm:$0xff] %vm308, %v307
        %s312 = sadd.s32 %s249, 1
        %s313 = scalar_lea.vmem %s207, %s312 [#allocation2]
        %v314 = vld [vmem:[%s313] sm:$0x1]
        %v315 = vld [vmem:[%s216 + $0x8] sm:$0xff]
        %v316 = vld [vmem:[%s216 + $0x28] sm:$0xff]
        %v317 = vld [vmem:[%s216 + $0x48] sm:$0xff]
        %v318 = vlaneseq
        %v319 = vshrl.u32 %v318, 7
        %v320 = vsub.s32 0, %v319
        %v321 = vrot.slane %v314, %v320
        %v322 = vmul.f32 %v315, %v321
        %v323 = vmul.f32 %v316, %v321
        %v324 = vmul.f32 %v317, %v321
        %v325 = vsub.f32 1.0, %v314
        %v326 = vmul.f32 %v325, %v271
        %v327 = vmul.f32 %v325, %v280
        %v328 = vmul.f32 %v325, %v289
        %v329 = vlaneseq
        %v330 = vshrl.u32 %v329, 7
        %v331 = vsub.s32 0, %v330
        %v332 = vrot.slane %v326, %v331
        %v333 = vlaneseq
        %v334 = vshrl.u32 %v333, 7
        %v335 = vsub.s32 0, %v334
        %v336 = vrot.slane %v327, %v335
        %v337 = vlaneseq
        %v338 = vshrl.u32 %v337, 7
        %v339 = vsub.s32 0, %v338
        %v340 = vrot.slane %v328, %v339
        %v341 = vadd.f32 %v322, %v332
        %v342 = vadd.f32 %v323, %v336
        %v343 = vadd.f32 %v324, %v340
        %344 = vst.msk [vmem:[%s243 + $0x8] sm:$0xff] %vm308, %v341
        %345 = vst.msk [vmem:[%s243 + $0x28] sm:$0xff] %vm308, %v342
        %346 = vst.msk [vmem:[%s243 + $0x48] sm:$0xff] %vm308, %v343
        %s347 = sadd.s32 %s249, 2
        %s348 = scalar_lea.vmem %s207, %s347 [#allocation2]
        %v349 = vld [vmem:[%s348] sm:$0x1]
        %v350 = vld [vmem:[%s216 + $0x10] sm:$0xff]
        %v351 = vld [vmem:[%s216 + $0x30] sm:$0xff]
        %v352 = vld [vmem:[%s216 + $0x50] sm:$0xff]
        %v353 = vlaneseq
        %v354 = vshrl.u32 %v353, 7
        %v355 = vsub.s32 0, %v354
        %v356 = vrot.slane %v349, %v355
        %v357 = vmul.f32 %v350, %v356
        %v358 = vmul.f32 %v351, %v356
        %v359 = vmul.f32 %v352, %v356
        %v360 = vsub.f32 1.0, %v349
        %v361 = vmul.f32 %v360, %v271
        %v362 = vmul.f32 %v360, %v280
        %v363 = vmul.f32 %v360, %v289
        %v364 = vlaneseq
        %v365 = vshrl.u32 %v364, 7
        %v366 = vsub.s32 0, %v365
        %v367 = vrot.slane %v361, %v366
        %v368 = vlaneseq
        %v369 = vshrl.u32 %v368, 7
        %v370 = vsub.s32 0, %v369
        %v371 = vrot.slane %v362, %v370
        %v372 = vlaneseq
        %v373 = vshrl.u32 %v372, 7
        %v374 = vsub.s32 0, %v373
        %v375 = vrot.slane %v363, %v374
        %v376 = vadd.f32 %v357, %v367
        %v377 = vadd.f32 %v358, %v371
        %v378 = vadd.f32 %v359, %v375
        %379 = vst.msk [vmem:[%s243 + $0x10] sm:$0xff] %vm308, %v376
        %380 = vst.msk [vmem:[%s243 + $0x30] sm:$0xff] %vm308, %v377
        %381 = vst.msk [vmem:[%s243 + $0x50] sm:$0xff] %vm308, %v378
        %s382 = sadd.s32 %s249, 3
        %s383 = scalar_lea.vmem %s207, %s382 [#allocation2]
        %v384 = vld [vmem:[%s383] sm:$0x1]
        %v385 = vld [vmem:[%s216 + $0x18] sm:$0xff]
        %v386 = vld [vmem:[%s216 + $0x38] sm:$0xff]
        %v387 = vld [vmem:[%s216 + $0x58] sm:$0xff]
        %v388 = vlaneseq
        %v389 = vshrl.u32 %v388, 7
        %v390 = vsub.s32 0, %v389
        %v391 = vrot.slane %v384, %v390
        %v392 = vmul.f32 %v385, %v391
        %v393 = vmul.f32 %v386, %v391
        %v394 = vmul.f32 %v387, %v391
        %v395 = vsub.f32 1.0, %v384
        %v396 = vmul.f32 %v395, %v271
        %v397 = vmul.f32 %v395, %v280
        %v398 = vmul.f32 %v395, %v289
        %v399 = vlaneseq
        %v400 = vshrl.u32 %v399, 7
        %v401 = vsub.s32 0, %v400
        %v402 = vrot.slane %v396, %v401
        %v403 = vlaneseq
        %v404 = vshrl.u32 %v403, 7
        %v405 = vsub.s32 0, %v404
        %v406 = vrot.slane %v397, %v405
        %v407 = vlaneseq
        %v408 = vshrl.u32 %v407, 7
        %v409 = vsub.s32 0, %v408
        %v410 = vrot.slane %v398, %v409
        %v411 = vadd.f32 %v392, %v402
        %v412 = vadd.f32 %v393, %v406
        %v413 = vadd.f32 %v394, %v410
        %414 = vst.msk [vmem:[%s243 + $0x18] sm:$0xff] %vm308, %v411
        %415 = vst.msk [vmem:[%s243 + $0x38] sm:$0xff] %vm308, %v412
        %416 = vst.msk [vmem:[%s243 + $0x58] sm:$0xff] %vm308, %v413
        %s417 = sand.u32 %s120, 1
        %s418 = scalar_lea.sflag [#allocation4], %s417
        %s419 = sand.u32 %s120, 1
        %s420 = smul.addr %s419, 96
        %s421 = scalar_lea.vmem [#allocation7], %s420
        // Predicated region
        $region41: #{tpu_custom_call.1} parent=31 // pred_check
          %p422 = pneg %p130
        $region42: #{tpu_custom_call.1} parent=31 // pred_check_branch
          %424 = sbr.rel (%p422) target = $region44
        $region43: #{tpu_custom_call.1} parent=31 // pred_region
          %s425 = smul.u32 4, %s28
          %s427 = ssub.s32 1536, 1536
          %428 = vsyncadd %s418, %s427
          %s429 = smul.addr %s27, 12
          %s430 = sadd.s32 %s425, %s429
          %s431 = smul.addr %s430, 128
          %s432 = scalar_lea.hbm %s3, %s431
          %s433 = sshll.u32 %s421, 4
          %s434 = int_to_ptr.vmem [resolvable:$true] %s433
          %439 = dma.vmem_to_hbm [thread:$0]  %s434, 1536, %s432, %s418, 128, 128, 8
        $region44: #{tpu_custom_call.1} parent=31 // pred_fallthru
          _
      $region32: #{tpu_custom_call.1} parent=5 // pred_fallthru
        _
      %p440 = scmp.le.s32.totalorder 2, %s18
      // Predicated region
      $region45: #{tpu_custom_call.1} parent=5 // pred_check
        %p441 = pneg %p440
      $region46: #{tpu_custom_call.1} parent=5 // pred_check_branch
        %443 = sbr.rel (%p441) target = $region48
      $region47: #{tpu_custom_call.1} parent=5 // pred_region
        %s444 = ssub.s32 %s18, 2
        // Predicated region
        $region49: #{tpu_custom_call.1} parent=47 // pred_check
          %p445 = pneg %p136
        $region50: #{tpu_custom_call.1} parent=47 // pred_check_branch
          %447 = sbr.rel (%p445) target = $region52
        $region51: #{tpu_custom_call.1} parent=47 // pred_region
          %s448 = sand.u32 %s121, 1
          %s449 = scalar_lea.sflag [#allocation4], %s448
          %s450 = sand.u32 %s121, 1
          %s451 = smul.addr %s450, 96
          %s452 = scalar_lea.vmem [#allocation7], %s451
          %453 = dma.done %s449, 1536
        $region52: #{tpu_custom_call.1} parent=47 // pred_fallthru
          _
      $region48: #{tpu_custom_call.1} parent=5 // pred_fallthru
        _
    $region6: #{tpu_custom_call.1} parent=1 // loop_footer
      %s22 = sadd.s32 1, %s18
    $region7: #{tpu_custom_call.1} parent=1 // loop_footer_branch
      %17 = sbr.rel target = $region3
    $region8: #{tpu_custom_call.1} parent=1 // loop_exit
      _
    %454 = vsyncpa [#allocation3], 1
    %s455 = scalar_lea.sflag [#allocation3], 1
    %456 = vsyncpa %s455, 1
    %457 = vsyncpa [#allocation6], 1
    %s458 = scalar_lea.sflag [#allocation6], 1
    %459 = vsyncpa %s458, 1
    %460 = vsyncpa [#allocation4], 1
    %s461 = scalar_lea.sflag [#allocation4], 1
    %462 = vsyncpa %s461, 1

</llo_original>
